<compile_context>
chip_gen: v5e
topology: v5e:2x2
jax: 0.10.0
libtpu: 0.0.40
codegen_flags: <defaults>
</compile_context>

<pallas_src>
import functools

import jax
import jax.numpy as jnp
from jax.experimental import pallas as pl
from jax.experimental.pallas import tpu as pltpu


def _round_up(x: int, m: int) -> int:
    return ((x + m - 1) // m) * m


def _focal_loss_kernel(logits_ref, target_ref, weight_ref, out_ref, acc_ref,
                       *, label_smoothing: float, gamma: float,
                       n_total: int, tile_n: int):
    pid = pl.program_id(0)

    @pl.when(pid == 0)
    def _init():
        acc_ref[0] = jnp.float32(0.0)

    # Load native dtype, cast to f32 in-kernel (v5e has no bf16 VPU/EUP anyway).
    x = logits_ref[...].astype(jnp.float32)        # (TILE_N, C)
    t = target_ref[...]                            # (TILE_N, 1) int32
    w = weight_ref[...].astype(jnp.float32)        # (1, C)
    tn, c = x.shape

    # Fused one-hot: no materialized onehot/clip tensors.
    class_ids = jax.lax.broadcasted_iota(jnp.int32, (tn, c), 1)
    is_hot = class_ids == t                                      # (TILE_N, C) bool

    lo = jnp.float32(label_smoothing / (c - 1))
    hi = jnp.float32(1.0 - label_smoothing)
    tgt = jnp.where(is_hot, hi, lo)                              # clamp(onehot, lo, hi)

    # softmax(x, axis=1) + 1e-7 (mirrors the PyTorch forward exactly).
    m = jnp.max(x, axis=1, keepdims=True)
    e = jnp.exp(x - m)
    s = jnp.sum(e, axis=1, keepdims=True)
    inv_s = pl.reciprocal(s, approx=False)                       # one per row, not per element
    sm = e * inv_s + jnp.float32(1e-7)
    ce = -jnp.log(sm) * tgt

    d = 1.0 - sm                                                 # can be ~-1e-7 when softmax ~ 1
    if gamma == 2.0:
        focal = d * d                                            # no transcendental pow
    else:
        focal = jnp.power(jnp.maximum(d, jnp.float32(0.0)), jnp.float32(gamma))

    per_sample = jnp.sum(focal * ce, axis=1, keepdims=True)      # (TILE_N, 1)
    wt = jnp.sum(jnp.where(is_hot, w, jnp.float32(0.0)),
                 axis=1, keepdims=True)                          # weight[target], gather-free

    # Mask rows past the true batch size (ragged last tile).
    row = pid * tile_n + jax.lax.broadcasted_iota(jnp.int32, (tn, 1), 0)
    contrib = jnp.where(row < n_total, per_sample * wt, jnp.float32(0.0))

    acc_ref[0] += jnp.sum(contrib)

    @pl.when(pid == pl.num_programs(0) - 1)
    def _finalize():
        out_ref[0, 0] = acc_ref[0] / jnp.float32(n_total)        # mean over the TRUE N


def focal_loss(logits, target, weight, *,
               label_smoothing: float = 0.0, gamma: float = 2.0,
               tile_n: int = 512):
    """Pallas TPU forward of FocalLoss. logits: (N, C), target: (N,), weight: (C,)."""
    n, c = logits.shape
    # Tile size: 512 rows by default (sized so 2x double-buffered f32 tiles plus a
    # few live intermediates fit comfortably in v7x's 64 MiB VMEM); shrink for tiny N.
    tn = min(int(tile_n), _round_up(n, 8))
    num_tiles = pl.cdiv(n, tn)

    target2d = target.astype(jnp.int32).reshape(n, 1)
    weight2d = weight.reshape(1, c)

    kernel = functools.partial(
        _focal_loss_kernel,
        label_smoothing=float(label_smoothing),
        gamma=float(gamma),
        n_total=int(n),
        tile_n=int(tn),
    )

    out = pl.pallas_call(
        kernel,
        out_shape=jax.ShapeDtypeStruct((1, 1), jnp.float32),
        grid_spec=pltpu.PrefetchScalarGridSpec(
            num_scalar_prefetch=0,
            grid=(num_tiles,),
            in_specs=[
                pl.BlockSpec((tn, c), lambda i: (i, 0)),   # logits tile (native dtype)
                pl.BlockSpec((tn, 1), lambda i: (i, 0)),   # target tile
                pl.BlockSpec((1, c), lambda i: (0, 0)),    # class weights (resident)
            ],
            out_specs=pl.BlockSpec(memory_space=pltpu.MemorySpace.SMEM),  # scalar loss
            scratch_shapes=[pltpu.SMEM((1,), jnp.float32)],               # accumulator
        ),
        compiler_params=pltpu.CompilerParams(
            dimension_semantics=("arbitrary",),            # reduction into one accumulator
            vmem_limit_bytes=32 * 1024 * 1024,
        ),
    )(logits, target2d, weight2d)
    return out[0, 0]


def focal_loss_ref(logits, target, weight, *, label_smoothing=0.0, gamma=2.0):
    """Pure-JAX reference mirroring the PyTorch forward."""
    c = logits.shape[1]
    onehot = jax.nn.one_hot(target, c, dtype=jnp.float32)
    tgt = jnp.clip(onehot, label_smoothing / (c - 1), 1.0 - label_smoothing)
    sm = jax.nn.softmax(logits.astype(jnp.float32), axis=1) + 1e-7
    ce = -jnp.log(sm) * tgt
    fl = jnp.power(1.0 - sm, gamma) * ce
    fl = jnp.sum(fl, axis=1) * weight[target]
    return jnp.mean(fl)


if __name__ == "__main__":
    key = jax.random.PRNGKey(0)
    k1, k2, k3, k4 = jax.random.split(key, 4)

    label_smoothing = 0.1
    gamma = 2.0

    # Small case (single tile).
    N, C = 16, 32
    logits = jax.random.normal(k1, (N, C), dtype=jnp.float32)
    target = jax.random.randint(k2, (N,), 0, C, dtype=jnp.int32)
    weight = jnp.linspace(0.5, 1.5, C, dtype=jnp.float32)

    out = jax.block_until_ready(
        focal_loss(logits, target, weight,
                   label_smoothing=label_smoothing, gamma=gamma))
    ref = focal_loss_ref(logits, target, weight,
                         label_smoothing=label_smoothing, gamma=gamma)
    assert jnp.allclose(out, ref, rtol=1e-5, atol=1e-5), (out, ref)

    # Multi-tile case with a ragged last tile (exercises grid accumulation + masking).
    N2, C2 = 1000, 32
    logits2 = jax.random.normal(k3, (N2, C2), dtype=jnp.float32)
    target2 = jax.random.randint(k4, (N2,), 0, C2, dtype=jnp.int32)
    weight2 = jnp.linspace(0.5, 1.5, C2, dtype=jnp.float32)

    out2 = jax.block_until_ready(
        focal_loss(logits2, target2, weight2,
                   label_smoothing=0.0, gamma=gamma, tile_n=256))
    ref2 = focal_loss_ref(logits2, target2, weight2,
                          label_smoothing=0.0, gamma=gamma)
    assert jnp.allclose(out2, ref2, rtol=1e-5, atol=1e-5), (out2, ref2)

    print("KERNEL_OK")
</pallas_src>

<mosaic_0001>
module attributes {stable_mosaic.version = 11 : i64} {
  func.func @_focal_loss_kernel(%arg0: i32, %arg1: memref<16x32xf32, #tpu.memory_space<vmem>>, %arg2: memref<16x1xi32, #tpu.memory_space<vmem>>, %arg3: memref<1x32xf32, #tpu.memory_space<vmem>>, %arg4: memref<1x1xf32, #tpu.memory_space<smem>>, %arg5: memref<1xf32, #tpu.memory_space<smem>>) attributes {dimension_semantics = [#tpu.dimension_semantics<arbitrary>], iteration_bounds = array<i64: 1>, scalar_prefetch = 0 : i64, scratch_operands = 1 : i64, tpu.core_type = #tpu.core_type<tc>, window_params = [{transform_indices = @transform_0, window_bounds = array<i64: 16, 32>}, {transform_indices = @transform_1, window_bounds = array<i64: 16, 1>}, {pipeline_mode = #tpu.pipeline_mode<synchronous>, transform_indices = @transform_2, window_bounds = array<i64: 1, 32>}, {transform_indices = @transform_3, window_bounds = array<i64: 1, 1>}]} {
    %c0_i32 = arith.constant 0 : i32
    %0 = arith.cmpi eq, %arg0, %c0_i32 : i32
    %1 = arith.extui %0 : i1 to i32
    %c0_i32_0 = arith.constant 0 : i32
    %2 = arith.cmpi ne, %1, %c0_i32_0 : i32
    scf.if %2 {
      %cst_22 = arith.constant 0.000000e+00 : f32
      %c0_23 = arith.constant 0 : index
      %59 = memref.load %arg5[%c0_23] : memref<1xf32, #tpu.memory_space<smem>>
      memref.store %cst_22, %arg5[%c0_23] : memref<1xf32, #tpu.memory_space<smem>>
    } else {
    }
    %c0 = arith.constant 0 : index
    %c0_1 = arith.constant 0 : index
    %3 = vector.load %arg1[%c0, %c0_1] : memref<16x32xf32, #tpu.memory_space<vmem>>, vector<16x32xf32>
    %c0_2 = arith.constant 0 : index
    %c0_3 = arith.constant 0 : index
    %4 = vector.load %arg2[%c0_2, %c0_3] : memref<16x1xi32, #tpu.memory_space<vmem>>, vector<16x1xi32>
    %c0_4 = arith.constant 0 : index
    %c0_5 = arith.constant 0 : index
    %5 = vector.load %arg3[%c0_4, %c0_5] : memref<1x32xf32, #tpu.memory_space<vmem>>, vector<1x32xf32>
    %6 = tpu.iota {dimensions = array<i32: 1>} : vector<16x32xi32>
    %7 = vector.broadcast %4 : vector<16x1xi32> to vector<16x32xi32>
    %8 = arith.cmpi eq, %6, %7 : vector<16x32xi32>
    %cst = arith.constant 0.899999976 : f32
    %cst_6 = arith.constant 0.0032258064 : f32
    %9 = vector.broadcast %cst : f32 to vector<16x32xf32>
    %10 = vector.broadcast %cst_6 : f32 to vector<16x32xf32>
    %11 = arith.select %8, %9, %10 : vector<16x32xi1>, vector<16x32xf32>
    %cst_7 = arith.constant dense<0xFF800000> : vector<16xf32>
    %12 = vector.multi_reduction <maximumf>, %3, %cst_7 [1] : vector<16x32xf32> to vector<16xf32>
    %13 = vector.shape_cast %12 : vector<16xf32> to vector<16x1xf32>
    %14 = vector.broadcast %13 : vector<16x1xf32> to vector<16x32xf32>
    %15 = arith.subf %3, %14 : vector<16x32xf32>
    %16 = math.exp %15 : vector<16x32xf32>
    %cst_8 = arith.constant dense<0.000000e+00> : vector<16xf32>
    %17 = vector.multi_reduction <add>, %16, %cst_8 [1] : vector<16x32xf32> to vector<16xf32>
    %18 = vector.shape_cast %17 : vector<16xf32> to vector<16x1xf32>
    %19 = tpu.reciprocal %18 : vector<16x1xf32> -> vector<16x1xf32>
    %20 = vector.broadcast %19 : vector<16x1xf32> to vector<16x32xf32>
    %21 = arith.mulf %16, %20 : vector<16x32xf32>
    %cst_9 = arith.constant 1.000000e-07 : f32
    %22 = vector.broadcast %cst_9 : f32 to vector<16x32xf32>
    %23 = arith.addf %21, %22 : vector<16x32xf32>
    %24 = math.log %23 : vector<16x32xf32>
    %cst_10 = arith.constant 0.000000e+00 : f32
    %25 = vector.broadcast %cst_10 : f32 to vector<16x32xf32>
    %26 = arith.subf %25, %24 : vector<16x32xf32>
    %27 = arith.mulf %26, %11 : vector<16x32xf32>
    %cst_11 = arith.constant 1.000000e+00 : f32
    %28 = vector.broadcast %cst_11 : f32 to vector<16x32xf32>
    %29 = arith.subf %28, %23 : vector<16x32xf32>
    %30 = arith.mulf %29, %29 : vector<16x32xf32>
    %31 = arith.mulf %30, %27 : vector<16x32xf32>
    %cst_12 = arith.constant dense<0.000000e+00> : vector<16xf32>
    %32 = vector.multi_reduction <add>, %31, %cst_12 [1] : vector<16x32xf32> to vector<16xf32>
    %33 = vector.shape_cast %32 : vector<16xf32> to vector<16x1xf32>
    %cst_13 = arith.constant 0.000000e+00 : f32
    %34 = vector.shape_cast %5 : vector<1x32xf32> to vector<1x32xf32>
    %35 = vector.broadcast %34 : vector<1x32xf32> to vector<16x32xf32>
    %36 = vector.broadcast %cst_13 : f32 to vector<16x32xf32>
    %37 = arith.select %8, %35, %36 : vector<16x32xi1>, vector<16x32xf32>
    %cst_14 = arith.constant dense<0.000000e+00> : vector<16xf32>
    %38 = vector.multi_reduction <add>, %37, %cst_14 [1] : vector<16x32xf32> to vector<16xf32>
    %39 = vector.shape_cast %38 : vector<16xf32> to vector<16x1xf32>
    %c16_i32 = arith.constant 16 : i32
    %40 = arith.muli %arg0, %c16_i32 : i32
    %41 = tpu.iota {dimensions = array<i32: 0>} : vector<16x1xi32>
    %42 = vector.broadcast %40 : i32 to vector<16x1xi32>
    %43 = arith.addi %42, %41 : vector<16x1xi32>
    %c16_i32_15 = arith.constant 16 : i32
    %44 = vector.broadcast %c16_i32_15 : i32 to vector<16x1xi32>
    %45 = arith.cmpi slt, %43, %44 : vector<16x1xi32>
    %46 = arith.mulf %33, %39 : vector<16x1xf32>
    %cst_16 = arith.constant 0.000000e+00 : f32
    %47 = vector.broadcast %cst_16 : f32 to vector<16x1xf32>
    %48 = arith.select %45, %46, %47 : vector<16x1xi1>, vector<16x1xf32>
    %c0_17 = arith.constant 0 : index
    %49 = memref.load %arg5[%c0_17] : memref<1xf32, #tpu.memory_space<smem>>
    %50 = vector.shape_cast %48 : vector<16x1xf32> to vector<1x16x1xf32>
    %cst_18 = arith.constant dense<0.000000e+00> : vector<1xf32>
    %51 = vector.multi_reduction <add>, %50, %cst_18 [1, 2] : vector<1x16x1xf32> to vector<1xf32>
    %52 = vector.shape_cast %51 : vector<1xf32> to vector<1x1x1xf32>
    %53 = vector.extract %52[0, 0, 0] : f32 from vector<1x1x1xf32>
    %54 = arith.addf %49, %53 : f32
    %c0_19 = arith.constant 0 : index
    %55 = memref.load %arg5[%c0_19] : memref<1xf32, #tpu.memory_space<smem>>
    memref.store %54, %arg5[%c0_19] : memref<1xf32, #tpu.memory_space<smem>>
    %c0_i32_20 = arith.constant 0 : i32
    %56 = arith.cmpi eq, %arg0, %c0_i32_20 : i32
    %57 = arith.extui %56 : i1 to i32
    %c0_i32_21 = arith.constant 0 : i32
    %58 = arith.cmpi ne, %57, %c0_i32_21 : i32
    scf.if %58 {
      %c0_22 = arith.constant 0 : index
      %59 = memref.load %arg5[%c0_22] : memref<1xf32, #tpu.memory_space<smem>>
      %cst_23 = arith.constant 1.600000e+01 : f32
      %60 = arith.divf %59, %cst_23 : f32
      %c0_24 = arith.constant 0 : index
      %c0_25 = arith.constant 0 : index
      %61 = memref.load %arg4[%c0_24, %c0_25] : memref<1x1xf32, #tpu.memory_space<smem>>
      memref.store %60, %arg4[%c0_24, %c0_25] : memref<1x1xf32, #tpu.memory_space<smem>>
    } else {
    }
    return
  }
  func.func @transform_0(%arg0: i32) -> (i32, i32) {
    %c0_i32 = arith.constant 0 : i32
    %c0_i32_0 = arith.constant 0 : i32
    return %arg0, %c0_i32 : i32, i32
  }
  func.func @transform_1(%arg0: i32) -> (i32, i32) {
    %c0_i32 = arith.constant 0 : i32
    %c0_i32_0 = arith.constant 0 : i32
    return %arg0, %c0_i32 : i32, i32
  }
  func.func @transform_2(%arg0: i32) -> (i32, i32) {
    %c0_i32 = arith.constant 0 : i32
    %c0_i32_0 = arith.constant 0 : i32
    %c0_i32_1 = arith.constant 0 : i32
    return %c0_i32, %c0_i32_0 : i32, i32
  }
  func.func @transform_3(%arg0: i32) -> (i32, i32) {
    %c0_i32 = arith.constant 0 : i32
    %c0_i32_0 = arith.constant 0 : i32
    %c0_i32_1 = arith.constant 0 : i32
    return %c0_i32, %c0_i32_0 : i32, i32
  }
}

</mosaic_0001>

<llo_original>
// kernel: tpu_custom_call.1
$region0: #{tpu_custom_call.1}
  #allocation0 [shape = 'u32[]', space=smem, size = 0x4, offset = 0x4, fixed_abs, tag = 'smem constant byte address 0x4 - core index']
  #allocation1 [shape = 'u32[72,128]{1,0:T(1,128)}', space=vmem, size = 0x9000, scoped, tag = 'internal scratch']
  #allocation2 [shape = 'f32[1]{0:T(128)}', space=smem, size = 0x200, scoped, tag = 'scratch operand']
  %s0 = inlined_call_operand.vmem [shape: f32[16,32], index: 0, kind: input, shape index: {}]
  %s1 = inlined_call_operand.vmem [shape: s32[16,1], index: 1, kind: input, shape index: {}]
  %s2 = inlined_call_operand.vmem [shape: f32[1,32], index: 2, kind: input, shape index: {}]
  %s3 = inlined_call_operand.hbm [shape: f32[1,1], index: 3, kind: output, shape index: {}]
  %s4 = sld [smem:[#allocation0]]
  $region30: #{tpu_custom_call.1} parent=0
    _
  %s6 = ssub.s32 1, %s4
  %s7 = scalar_select 0, %s6, %s4
  $region1: #{tpu_custom_call.1} parent=0
    #allocation3 [shape = 'u8[512]{0}', space=smem, size = 0x200, scoped, tag = 'output window, operand 0, single buffered']
    #allocation4 [shape = 's32[1]{0}', space=sflag, size = 0x4, scoped, tag = 'scoped memory for tpu_custom_call.1']
    %8 = vsyncpa [#allocation4], 0
    // Predicated region
    $region2: #{tpu_custom_call.1} parent=1 // pred_check
      _
    $region3: #{tpu_custom_call.1} parent=1 // pred_check_branch
      %10 = sbr.rel (0) target = $region5
    $region4: #{tpu_custom_call.1} parent=1 // pred_region
      _
    $region5: #{tpu_custom_call.1} parent=1 // pred_fallthru
      _
    // Predicated region
    $region6: #{tpu_custom_call.1} parent=1 // pred_check
      _
    $region7: #{tpu_custom_call.1} parent=1 // pred_check_branch
      %12 = sbr.rel (0) target = $region9
    $region8: #{tpu_custom_call.1} parent=1 // pred_region
      _
    $region9: #{tpu_custom_call.1} parent=1 // pred_fallthru
      _
    // Predicated region
    $region10: #{tpu_custom_call.1} parent=1 // pred_check
      _
    $region11: #{tpu_custom_call.1} parent=1 // pred_check_branch
      %14 = sbr.rel (0) target = $region13
    $region12: #{tpu_custom_call.1} parent=1 // pred_region
      _
    $region13: #{tpu_custom_call.1} parent=1 // pred_fallthru
      _
    %p15 = scmp.eq.s32.totalorder 0, 0
    // Predicated region
    $region14: #{tpu_custom_call.1} parent=1 // pred_check
      %p16 = pneg %p15
    $region15: #{tpu_custom_call.1} parent=1 // pred_check_branch
      %18 = sbr.rel (%p16) target = $region17
    $region16: #{tpu_custom_call.1} parent=1 // pred_region
      %s19 = scalar_lea.smem [#allocation2], 0
      %20 = sst [smem:[%s19]] 0.0
    $region17: #{tpu_custom_call.1} parent=1 // pred_fallthru
      _
    %v21 = vld [vmem:[%s0] sm:$0xff]
    %v22 = vld [vmem:[%s0 + $0x8] sm:$0xff]
    %v23 = vld [vmem:[%s1] sm:$0xff]
    %v24 = vld [vmem:[%s1 + $0x8] sm:$0xff]
    %v25 = vld [vmem:[%s2] sm:$0x1]
    %v26 = vlaneseq
    %v27 = vand.u32 %v26, 127
    %28 = vset.pattern.permute.xlu0 0
    %29 = vperm.xlu0 %28, %v23
    %v30 = vpop.permute.xlu0 %29
    %31 = vset.pattern.permute.xlu0 0
    %32 = vperm.xlu0 %31, %v24
    %v33 = vpop.permute.xlu0 %32
    %vm34 = vcmp.eq.s32.totalorder %v27, %v30
    %vm35 = vcmp.eq.s32.totalorder %v27, %v33
    %v36 = vsel %vm34, 0.9, 0.0032258064
    %v37 = vsel %vm35, 0.9, 0.0032258064
    %vm38 = vcmask 261120
    %v39 = vsel %vm38, %v21, -inf
    %40 = vmax.xlane.f32.xlu0 %v39
    %v41 = vpop.xlane.xlu0 %40
    %v42 = vsel %vm38, %v22, -inf
    %43 = vmax.xlane.f32.xlu0 %v42
    %v44 = vpop.xlane.xlu0 %43
    %v45 = vsub.f32 %v21, %v41
    %v46 = vsub.f32 %v22, %v44
    %v47 = vmul.f32 %v45, 1.442695
    %v48 = vpow.pop %v47
    %v49 = vmul.f32 %v46, 1.442695
    %v50 = vpow.pop %v49
    %v51 = vsel %vm38, %v48, 0.0
    %52 = vadd.xlane.f32.xlu0 %v51
    %v53 = vpop.xlane.xlu0 %52
    %v54 = vsel %vm38, %v50, 0.0
    %55 = vadd.xlane.f32.xlu0 %v54
    %v56 = vpop.xlane.xlu0 %55
    %v57 = vrcp.pop %v53
    %v58 = vmul.f32 %v53, %v57
    %v59 = vsub.f32 1.0, %v58
    %v60 = vmul.f32 %v57, %v59
    %v61 = vadd.f32 %v57, %v60
    %vm62 = vweird.f32 %v53
    %vm63 = vweird.f32 %v57
    %vm64 = vmor %vm62, %vm63
    %v65 = vsel %vm64, %v57, %v61
    %v66 = vand.u32 2147483647, %v53
    %vm67 = vcmp.eq.f32.partialorder %v66, 8.507059e+37
    %v68 = vand.u32 %v53, 2147483648
    %v69 = vor.u32 1.1754944e-38, %v68
    %v70 = vsel %vm67, %v69, %v65
    %v71 = vrcp.pop %v56
    %v72 = vmul.f32 %v56, %v71
    %v73 = vsub.f32 1.0, %v72
    %v74 = vmul.f32 %v71, %v73
    %v75 = vadd.f32 %v71, %v74
    %vm76 = vweird.f32 %v56
    %vm77 = vweird.f32 %v71
    %vm78 = vmor %vm76, %vm77
    %v79 = vsel %vm78, %v71, %v75
    %v80 = vand.u32 2147483647, %v56
    %vm81 = vcmp.eq.f32.partialorder %v80, 8.507059e+37
    %v82 = vand.u32 %v56, 2147483648
    %v83 = vor.u32 1.1754944e-38, %v82
    %v84 = vsel %vm81, %v83, %v79
    %v85 = vmul.f32 %v48, %v70
    %v86 = vmul.f32 %v50, %v84
    %v87 = vadd.f32 %v85, 1e-07
    %v88 = vadd.f32 %v86, 1e-07
    %v89 = vlog2.pop %v87
    %v90 = vmul.f32 %v89, 0.6931472
    %v91 = vlog2.pop %v88
    %v92 = vmul.f32 %v91, 0.6931472
    %v93 = vsub.f32 0.0, %v90
    %v94 = vsub.f32 0.0, %v92
    %v95 = vmul.f32 %v93, %v36
    %v96 = vmul.f32 %v94, %v37
    %v97 = vsub.f32 1.0, %v87
    %v98 = vsub.f32 1.0, %v88
    %v99 = vmul.f32 %v97, %v97
    %v100 = vmul.f32 %v98, %v98
    %v101 = vmul.f32 %v99, %v95
    %v102 = vmul.f32 %v100, %v96
    %v103 = vsel %vm38, %v101, 0.0
    %104 = vadd.xlane.f32.xlu0 %v103
    %v105 = vpop.xlane.xlu0 %104
    %v106 = vsel %vm38, %v102, 0.0
    %107 = vadd.xlane.f32.xlu0 %v106
    %v108 = vpop.xlane.xlu0 %107
    %v110 = vperm.slane %v25, 0
    %v112 = vsel %vm34, %v110, 0.0
    %v113 = vsel %vm35, %v110, 0.0
    %v114 = vsel %vm38, %v112, 0.0
    %115 = vadd.xlane.f32.xlu0 %v114
    %v116 = vpop.xlane.xlu0 %115
    %v117 = vsel %vm38, %v113, 0.0
    %118 = vadd.xlane.f32.xlu0 %v117
    %v119 = vpop.xlane.xlu0 %118
    %s120 = smul.u32 0, 16
    %v121 = vlaneseq
    %v122 = vshrl.u32 %v121, 7
    %v123 = vadd.s32 %v122, 8
    %v124 = vstv %s120
    %v125 = vadd.s32 %v124, %v122
    %v126 = vadd.s32 %v124, %v123
    %vm127 = vcmp.lt.s32.totalorder %v125, 16
    %vm128 = vcmp.lt.s32.totalorder %v126, 16
    %v129 = vmul.f32 %v105, %v116
    %v130 = vmul.f32 %v108, %v119
    %v131 = vsel %vm127, %v129, 0.0
    %v132 = vsel %vm128, %v130, 0.0
    %s133 = sld [smem:[#allocation2]]
    %vm134 = vcmask 7168
    %v135 = vsel %vm134, %v131, 0.0
    %v136 = vsel %vm134, %v132, 0.0
    %v137 = vadd.f32 %v135, %v136
    %138 = vadd.xlane.f32.xlu0 %v137
    %v139 = vpop.xlane.xlu0 %138
    %v140 = vrot.slane %v139, 4
    %v141 = vadd.f32 %v139, %v140
    %v142 = vrot.slane %v141, 2
    %v143 = vadd.f32 %v141, %v142
    %v144 = vrot.slane %v143, 1
    %v145 = vadd.f32 %v143, %v144
    %s146 = vtos %v145
    %s147 = sadd.f32 %s133, %s146
    %s148 = scalar_lea.smem [#allocation2], 0
    %149 = sst [smem:[%s148]] %s147
    // Predicated region
    $region18: #{tpu_custom_call.1} parent=1 // pred_check
      %p150 = pneg %p15
    $region19: #{tpu_custom_call.1} parent=1 // pred_check_branch
      %152 = sbr.rel (%p150) target = $region21
    $region20: #{tpu_custom_call.1} parent=1 // pred_region
      %s153 = sld [smem:[#allocation2]]
      %v154 = vrcp.pop 16.0
      %v155 = vmul.f32 16.0, %v154
      %v156 = vsub.f32 1.0, %v155
      %v157 = vmul.f32 %v154, %v156
      %v158 = vadd.f32 %v154, %v157
      %vm159 = vweird.f32 %v154
      %v160 = vsel %vm159, %v154, %v158
      %s161 = vtos %v160
      %s162 = smul.f32 %s153, %s161
      %s163 = scalar_lea.smem [#allocation3], 0
      %164 = sst [smem:[%s163]] %s162
    $region21: #{tpu_custom_call.1} parent=1 // pred_fallthru
      _
    // Predicated region
    $region22: #{tpu_custom_call.1} parent=1 // pred_check
      _
    $region23: #{tpu_custom_call.1} parent=1 // pred_check_branch
      %166 = sbr.rel (0) target = $region25
    $region24: #{tpu_custom_call.1} parent=1 // pred_region
      %168 = vsyncadd [#allocation4], 0
      %s170 = sshll.u32 %s3, 4
      %s171 = int_to_ptr.hbm [resolvable:$true] %s170
      %173 = dma.smem_to_hbm [#allocation3], 16, %s171, [#allocation4]
    $region25: #{tpu_custom_call.1} parent=1 // pred_fallthru
      _
    // Predicated region
    $region26: #{tpu_custom_call.1} parent=1 // pred_check
      _
    $region27: #{tpu_custom_call.1} parent=1 // pred_check_branch
      %175 = sbr.rel (0) target = $region29
    $region28: #{tpu_custom_call.1} parent=1 // pred_region
      %177 = dma.done [#allocation4], 16
    $region29: #{tpu_custom_call.1} parent=1 // pred_fallthru
      _
    %178 = sfence
    %179 = vsyncpa [#allocation4], 1

</llo_original>
